<compile_context>
chip_gen: v6e
topology: v6e:2x2x1
jax: 0.10.0
libtpu: 0.0.40
codegen_flags: <defaults>
</compile_context>

<pallas_src>
import functools
import math

import jax
import jax.numpy as jnp
from jax.experimental import pallas as pl
from jax.experimental.pallas import tpu as pltpu


def _label_relaxation_kernel(pred_ref, tgt_ref, out_ref, *, alpha, n_rows):
    i = pl.program_id(0)
    tm = pred_ref.shape[0]

    x = pred_ref[...].astype(jnp.float32)                    # (tm, C) logits
    tgt = tgt_ref[...]                                        # (tm, 1) int32

    # One-hot target mask built in-kernel.
    col = jax.lax.broadcasted_iota(jnp.int32, x.shape, 1)     # (tm, C)
    t = (col == tgt).astype(jnp.float32)

    # Row-wise softmax pieces: a single exp per element, logs are per-row only.
    m = jnp.max(x, axis=-1, keepdims=True)                    # (tm, 1)
    e = jnp.exp(x - m)                                        # (tm, C)  EUP
    sum_e = jnp.sum(e, axis=-1, keepdims=True)                # (tm, 1)
    log_sum_e = jnp.log(sum_e)                                # (tm, 1)
    inv_sum_e = 1.0 / sum_e                                   # per-row divide

    # Target-entry logit / probability, extracted via the one-hot mask.
    x_y = jnp.sum(x * t, axis=-1, keepdims=True)              # (tm, 1)
    e_y = jnp.sum(e * t, axis=-1, keepdims=True)              # (tm, 1)
    log_p_y = (x_y - m) - log_sum_e                           # log-softmax @ target
    p_y = e_y * inv_sum_e
    s = (sum_e - e_y) * inv_sum_e                             # sum_{j != y} p_j

    # Closed form of the per-row KL sum  sum_j tc_j * (log tc_j - log p_j):
    #   target entry        -> (1-a) * (log(1-a) - log p_y)
    #   all off-target ones -> a     * (log a    - log s)
    # (uses gz_threshold = 0.1 in (0,1), as hard-coded in the module)
    one_m_a = 1.0 - alpha
    kl_row = (one_m_a * (math.log(one_m_a) - log_p_y)
              + alpha * (math.log(alpha) - jnp.log(s)))       # (tm, 1)

    # Mask rows past the true batch size (ragged last tile).
    row = i * tm + jax.lax.broadcasted_iota(jnp.int32, (tm, 1), 0)
    valid = row < n_rows
    kl_part = jnp.sum(jnp.where(valid, kl_row, 0.0))
    keep = valid & (p_y <= one_m_a)            # rows that keep the divergence
    cnt_part = jnp.sum(jnp.where(keep, 1.0, 0.0))

    # Lane/sublane-dense (8,128) partial block: sublane 0 = KL, sublane 1 = count.
    sub = jax.lax.broadcasted_iota(jnp.int32, (8, 128), 0)
    out_ref[...] = jnp.where(sub == 0, kl_part,
                             jnp.where(sub == 1, cnt_part, 0.0))


def _pick_tm(n_rows, n_cls, *, max_tile_bytes=2 << 20, cap=1024):
    """Row tile: large enough to amortize per-step pipeline overhead, small
    enough that the double-buffered (tm, C) f32 block stays a few MiB."""
    if n_rows <= 8:
        return n_rows                          # single block == full tiny batch
    tm = max(8, min(max_tile_bytes // (4 * max(n_cls, 1)), cap))
    tm = (tm // 8) * 8
    tm = min(tm, (n_rows // 8) * 8)            # never exceed the batch
    return max(tm, 8)


def label_relaxation_loss(pred, target, *, alpha=0.1, tm=None):
    """Forward pass of LabelRelaxationLoss (alpha=0.1, gz_threshold=0.1,
    logits provided, integer targets one-hot encoded in-kernel)."""
    n, c = pred.shape
    if tm is None:
        tm = _pick_tm(n, c)
    num_tiles = int(pl.cdiv(n, tm))
    tgt2d = target.astype(jnp.int32).reshape(n, 1)

    partials = pl.pallas_call(
        functools.partial(_label_relaxation_kernel, alpha=float(alpha), n_rows=n),
        out_shape=jax.ShapeDtypeStruct((num_tiles * 8, 128), jnp.float32),
        grid_spec=pltpu.PrefetchScalarGridSpec(
            num_scalar_prefetch=0,
            grid=(num_tiles,),
            in_specs=[
                pl.BlockSpec((tm, c), lambda i: (i, 0)),
                pl.BlockSpec((tm, 1), lambda i: (i, 0)),
            ],
            out_specs=pl.BlockSpec((8, 128), lambda i: (i, 0)),
        ),
        compiler_params=pltpu.CompilerParams(
            dimension_semantics=("parallel",)),
    )(pred, tgt2d)

    partials = partials.reshape(num_tiles, 8, 128)
    kl_sum = jnp.sum(partials[:, 0, 0])
    cnt = jnp.sum(partials[:, 1, 0])
    divergence = kl_sum / jnp.float32(n * c)       # kl_div(reduction='mean')
    return divergence * cnt / jnp.float32(n)       # mean(where(pt > 1-a, 0, div))


def _reference_loss(pred, target, alpha=0.1, gz=0.1):
    p = jax.nn.softmax(pred.astype(jnp.float32), axis=-1)
    t = jax.nn.one_hot(target, pred.shape[1], dtype=jnp.float32)
    s = jnp.sum((1.0 - t) * p, axis=-1, keepdims=True)
    pred_hat = alpha * p / s
    tc = jnp.where(t > gz, 1.0 - alpha, pred_hat)
    kl = jnp.where(tc > 0.0, tc * jnp.log(tc), 0.0) - tc * jnp.log(p)
    div = jnp.mean(kl)
    pt = jnp.sum(p * t, axis=-1)
    res = jnp.where(pt > 1.0 - alpha, 0.0, div)
    return jnp.mean(res)


if __name__ == "__main__":
    key = jax.random.PRNGKey(0)

    # Case 1: tile-aligned batch.
    k1, k2 = jax.random.split(key)
    n, c = 16, 32
    pred = jax.random.normal(k1, (n, c), dtype=jnp.float32) * 2.0
    target = jax.random.randint(k2, (n,), 0, c, dtype=jnp.int32)
    out = jax.block_until_ready(label_relaxation_loss(pred, target))
    ref = jax.block_until_ready(_reference_loss(pred, target))
    assert jnp.allclose(out, ref, rtol=1e-4, atol=1e-6), (out, ref)

    # Case 2: ragged batch (exercises the masked last tile, no divisibility assert).
    k3, k4 = jax.random.split(k2)
    n2 = 13
    pred2 = jax.random.normal(k3, (n2, c), dtype=jnp.float32) * 2.0
    target2 = jax.random.randint(k4, (n2,), 0, c, dtype=jnp.int32)
    out2 = jax.block_until_ready(label_relaxation_loss(pred2, target2))
    ref2 = jax.block_until_ready(_reference_loss(pred2, target2))
    assert jnp.allclose(out2, ref2, rtol=1e-4, atol=1e-6), (out2, ref2)

    print("KERNEL_OK")
</pallas_src>

<mosaic_0001>
module attributes {stable_mosaic.version = 11 : i64} {
  func.func @_label_relaxation_kernel(%arg0: i32, %arg1: memref<16x32xf32, #tpu.memory_space<vmem>>, %arg2: memref<16x1xi32, #tpu.memory_space<vmem>>, %arg3: memref<8x128xf32, #tpu.memory_space<vmem>>) attributes {dimension_semantics = [#tpu.dimension_semantics<parallel>], iteration_bounds = array<i64: 1>, scalar_prefetch = 0 : i64, scratch_operands = 0 : i64, tpu.core_type = #tpu.core_type<tc>, window_params = [{transform_indices = @transform_0, window_bounds = array<i64: 16, 32>}, {transform_indices = @transform_1, window_bounds = array<i64: 16, 1>}, {transform_indices = @transform_2, window_bounds = array<i64: 8, 128>}]} {
    %c0 = arith.constant 0 : index
    %c0_0 = arith.constant 0 : index
    %0 = vector.load %arg1[%c0, %c0_0] : memref<16x32xf32, #tpu.memory_space<vmem>>, vector<16x32xf32>
    %c0_1 = arith.constant 0 : index
    %c0_2 = arith.constant 0 : index
    %1 = vector.load %arg2[%c0_1, %c0_2] : memref<16x1xi32, #tpu.memory_space<vmem>>, vector<16x1xi32>
    %2 = tpu.iota {dimensions = array<i32: 1>} : vector<16x32xi32>
    %3 = vector.broadcast %1 : vector<16x1xi32> to vector<16x32xi32>
    %4 = arith.cmpi eq, %2, %3 : vector<16x32xi32>
    %5 = arith.extui %4 : vector<16x32xi1> to vector<16x32xi32>
    %6 = arith.sitofp %5 : vector<16x32xi32> to vector<16x32xf32>
    %cst = arith.constant dense<0xFF800000> : vector<16xf32>
    %7 = vector.multi_reduction <maximumf>, %0, %cst [1] : vector<16x32xf32> to vector<16xf32>
    %8 = vector.shape_cast %7 : vector<16xf32> to vector<16x1xf32>
    %9 = vector.broadcast %8 : vector<16x1xf32> to vector<16x32xf32>
    %10 = arith.subf %0, %9 : vector<16x32xf32>
    %11 = math.exp %10 : vector<16x32xf32>
    %cst_3 = arith.constant dense<0.000000e+00> : vector<16xf32>
    %12 = vector.multi_reduction <add>, %11, %cst_3 [1] : vector<16x32xf32> to vector<16xf32>
    %13 = vector.shape_cast %12 : vector<16xf32> to vector<16x1xf32>
    %14 = math.log %13 : vector<16x1xf32>
    %cst_4 = arith.constant 1.000000e+00 : f32
    %15 = vector.broadcast %cst_4 : f32 to vector<16x1xf32>
    %16 = arith.divf %15, %13 : vector<16x1xf32>
    %17 = arith.mulf %0, %6 : vector<16x32xf32>
    %cst_5 = arith.constant dense<0.000000e+00> : vector<16xf32>
    %18 = vector.multi_reduction <add>, %17, %cst_5 [1] : vector<16x32xf32> to vector<16xf32>
    %19 = vector.shape_cast %18 : vector<16xf32> to vector<16x1xf32>
    %20 = arith.mulf %11, %6 : vector<16x32xf32>
    %cst_6 = arith.constant dense<0.000000e+00> : vector<16xf32>
    %21 = vector.multi_reduction <add>, %20, %cst_6 [1] : vector<16x32xf32> to vector<16xf32>
    %22 = vector.shape_cast %21 : vector<16xf32> to vector<16x1xf32>
    %23 = arith.subf %19, %8 : vector<16x1xf32>
    %24 = arith.subf %23, %14 : vector<16x1xf32>
    %25 = arith.mulf %22, %16 : vector<16x1xf32>
    %26 = arith.subf %13, %22 : vector<16x1xf32>
    %27 = arith.mulf %26, %16 : vector<16x1xf32>
    %cst_7 = arith.constant -0.105360515 : f32
    %28 = vector.broadcast %cst_7 : f32 to vector<16x1xf32>
    %29 = arith.subf %28, %24 : vector<16x1xf32>
    %cst_8 = arith.constant 0.899999976 : f32
    %30 = vector.broadcast %cst_8 : f32 to vector<16x1xf32>
    %31 = arith.mulf %30, %29 : vector<16x1xf32>
    %32 = math.log %27 : vector<16x1xf32>
    %cst_9 = arith.constant -2.30258512 : f32
    %33 = vector.broadcast %cst_9 : f32 to vector<16x1xf32>
    %34 = arith.subf %33, %32 : vector<16x1xf32>
    %cst_10 = arith.constant 1.000000e-01 : f32
    %35 = vector.broadcast %cst_10 : f32 to vector<16x1xf32>
    %36 = arith.mulf %35, %34 : vector<16x1xf32>
    %37 = arith.addf %31, %36 : vector<16x1xf32>
    %c16_i32 = arith.constant 16 : i32
    %38 = arith.muli %arg0, %c16_i32 : i32
    %39 = tpu.iota {dimensions = array<i32: 0>} : vector<16x1xi32>
    %40 = vector.broadcast %38 : i32 to vector<16x1xi32>
    %41 = arith.addi %40, %39 : vector<16x1xi32>
    %c16_i32_11 = arith.constant 16 : i32
    %42 = vector.broadcast %c16_i32_11 : i32 to vector<16x1xi32>
    %43 = arith.cmpi slt, %41, %42 : vector<16x1xi32>
    %cst_12 = arith.constant 0.000000e+00 : f32
    %44 = vector.broadcast %cst_12 : f32 to vector<16x1xf32>
    %45 = arith.select %43, %37, %44 : vector<16x1xi1>, vector<16x1xf32>
    %46 = vector.shape_cast %45 : vector<16x1xf32> to vector<1x16x1xf32>
    %cst_13 = arith.constant dense<0.000000e+00> : vector<1xf32>
    %47 = vector.multi_reduction <add>, %46, %cst_13 [1, 2] : vector<1x16x1xf32> to vector<1xf32>
    %48 = vector.shape_cast %47 : vector<1xf32> to vector<1x1x1xf32>
    %49 = vector.extract %48[0, 0, 0] : f32 from vector<1x1x1xf32>
    %cst_14 = arith.constant 0.899999976 : f32
    %50 = vector.broadcast %cst_14 : f32 to vector<16x1xf32>
    %51 = arith.cmpf ole, %25, %50 : vector<16x1xf32>
    %52 = arith.andi %43, %51 : vector<16x1xi1>
    %cst_15 = arith.constant 1.000000e+00 : f32
    %cst_16 = arith.constant 0.000000e+00 : f32
    %53 = vector.broadcast %cst_15 : f32 to vector<16x1xf32>
    %54 = vector.broadcast %cst_16 : f32 to vector<16x1xf32>
    %55 = arith.select %52, %53, %54 : vector<16x1xi1>, vector<16x1xf32>
    %56 = vector.shape_cast %55 : vector<16x1xf32> to vector<1x16x1xf32>
    %cst_17 = arith.constant dense<0.000000e+00> : vector<1xf32>
    %57 = vector.multi_reduction <add>, %56, %cst_17 [1, 2] : vector<1x16x1xf32> to vector<1xf32>
    %58 = vector.shape_cast %57 : vector<1xf32> to vector<1x1x1xf32>
    %59 = vector.extract %58[0, 0, 0] : f32 from vector<1x1x1xf32>
    %60 = tpu.iota {dimensions = array<i32: 0>} : vector<8x128xi32>
    %c0_i32 = arith.constant 0 : i32
    %61 = vector.broadcast %c0_i32 : i32 to vector<8x128xi32>
    %62 = arith.cmpi eq, %60, %61 : vector<8x128xi32>
    %c1_i32 = arith.constant 1 : i32
    %63 = vector.broadcast %c1_i32 : i32 to vector<8x128xi32>
    %64 = arith.cmpi eq, %60, %63 : vector<8x128xi32>
    %cst_18 = arith.constant 0.000000e+00 : f32
    %65 = vector.broadcast %59 : f32 to vector<8x128xf32>
    %66 = vector.broadcast %cst_18 : f32 to vector<8x128xf32>
    %67 = arith.select %64, %65, %66 : vector<8x128xi1>, vector<8x128xf32>
    %68 = vector.broadcast %49 : f32 to vector<8x128xf32>
    %69 = arith.select %62, %68, %67 : vector<8x128xi1>, vector<8x128xf32>
    %c0_19 = arith.constant 0 : index
    %c0_20 = arith.constant 0 : index
    %70 = vector.load %arg3[%c0_19, %c0_20] : memref<8x128xf32, #tpu.memory_space<vmem>>, vector<8x128xf32>
    tpu.vector_store %arg3[%c0_19, %c0_20], %69 {strides = array<i32>} : memref<8x128xf32, #tpu.memory_space<vmem>>, vector<8x128xf32>,
    return
  }
  func.func @transform_0(%arg0: i32) -> (i32, i32) {
    %c0_i32 = arith.constant 0 : i32
    %c0_i32_0 = arith.constant 0 : i32
    return %arg0, %c0_i32 : i32, i32
  }
  func.func @transform_1(%arg0: i32) -> (i32, i32) {
    %c0_i32 = arith.constant 0 : i32
    %c0_i32_0 = arith.constant 0 : i32
    return %arg0, %c0_i32 : i32, i32
  }
  func.func @transform_2(%arg0: i32) -> (i32, i32) {
    %c0_i32 = arith.constant 0 : i32
    %c0_i32_0 = arith.constant 0 : i32
    return %arg0, %c0_i32 : i32, i32
  }
}

</mosaic_0001>

<llo_original>
// kernel: tpu_custom_call.1
$region0: #{tpu_custom_call.1}
  #allocation0 [shape = 'u32[]', space=smem, size = 0x4, offset = 0x4, fixed_abs, tag = 'smem constant byte address 0x4 - core index']
  #allocation1 [shape = 'u32[144,128]{1,0:T(1,128)}', space=vmem, size = 0x12000, scoped, tag = 'internal scratch']
  %s0 = inlined_call_operand.vmem [shape: f32[16,32], index: 0, kind: input, shape index: {}]
  %s1 = inlined_call_operand.vmem [shape: s32[16,1], index: 1, kind: input, shape index: {}]
  %s2 = inlined_call_operand.hbm [shape: f32[8,128], index: 2, kind: output, shape index: {}]
  %s3 = sld [smem:[#allocation0]]
  $region18: #{tpu_custom_call.1} parent=0
    _
  %s5 = ssub.s32 1, %s3
  %s6 = scalar_select 0, %s5, %s3
  $region1: #{tpu_custom_call.1} parent=0
    #allocation2 [shape = 'u8[4096]{0}', space=vmem, size = 0x1000, scoped, tag = 'output window, operand 0, single buffered']
    #allocation3 [shape = 's32[1]{0}', space=sflag, size = 0x4, scoped, tag = 'scoped memory for tpu_custom_call.1']
    %7 = vsyncpa [#allocation3], 0
    // Predicated region
    $region2: #{tpu_custom_call.1} parent=1 // pred_check
      _
    $region3: #{tpu_custom_call.1} parent=1 // pred_check_branch
      %9 = sbr.rel (0) target = $region5
    $region4: #{tpu_custom_call.1} parent=1 // pred_region
      _
    $region5: #{tpu_custom_call.1} parent=1 // pred_fallthru
      _
    // Predicated region
    $region6: #{tpu_custom_call.1} parent=1 // pred_check
      _
    $region7: #{tpu_custom_call.1} parent=1 // pred_check_branch
      %11 = sbr.rel (0) target = $region9
    $region8: #{tpu_custom_call.1} parent=1 // pred_region
      _
    $region9: #{tpu_custom_call.1} parent=1 // pred_fallthru
      _
    %v12 = vld [vmem:[%s0] sm:$0xff]
    %v13 = vld [vmem:[%s0 + $0x8] sm:$0xff]
    %v14 = vld [vmem:[%s1] sm:$0xff]
    %v15 = vld [vmem:[%s1 + $0x8] sm:$0xff]
    %v16 = vlaneseq
    %v17 = vand.u32 %v16, 127
    %18 = vset.pattern.permute.xlu0 0
    %19 = vperm.xlu0 %18, %v14
    %v20 = vpop.permute.xlu0 %19
    %21 = vset.pattern.permute.xlu0 0
    %22 = vperm.xlu0 %21, %v15
    %v23 = vpop.permute.xlu0 %22
    %vm24 = vcmp.eq.s32.totalorder %v17, %v20
    %vm25 = vcmp.eq.s32.totalorder %v17, %v23
    %v26 = vsel %vm24, 1, 0
    %v27 = vsel %vm25, 1, 0
    %v28 = vcvt.s32.f32 %v26
    %v29 = vcvt.s32.f32 %v27
    %vm30 = vcmask 261120
    %v31 = vsel %vm30, %v12, -inf
    %32 = vmax.xlane.f32.xlu0 %v31
    %v33 = vpop.xlane.xlu0 %32
    %v34 = vsel %vm30, %v13, -inf
    %35 = vmax.xlane.f32.xlu0 %v34
    %v36 = vpop.xlane.xlu0 %35
    %v37 = vsub.f32 %v12, %v33
    %v38 = vsub.f32 %v13, %v36
    %v39 = vmul.f32 %v37, 1.442695
    %v40 = vpow.pop %v39
    %v41 = vmul.f32 %v38, 1.442695
    %v42 = vpow.pop %v41
    %v43 = vsel %vm30, %v40, 0.0
    %44 = vadd.xlane.f32.xlu0 %v43
    %v45 = vpop.xlane.xlu0 %44
    %v46 = vsel %vm30, %v42, 0.0
    %47 = vadd.xlane.f32.xlu0 %v46
    %v48 = vpop.xlane.xlu0 %47
    %v49 = vlog2.pop %v45
    %v50 = vmul.f32 %v49, 0.6931472
    %v51 = vlog2.pop %v48
    %v52 = vmul.f32 %v51, 0.6931472
    %v53 = vrcp.pop %v45
    %v54 = vmul.f32 1.0, %v53
    %v55 = vrcp.pop %v48
    %v56 = vmul.f32 1.0, %v55
    %v57 = vmul.f32 %v12, %v28
    %v58 = vmul.f32 %v13, %v29
    %v59 = vsel %vm30, %v57, 0.0
    %60 = vadd.xlane.f32.xlu0 %v59
    %v61 = vpop.xlane.xlu0 %60
    %v62 = vsel %vm30, %v58, 0.0
    %63 = vadd.xlane.f32.xlu0 %v62
    %v64 = vpop.xlane.xlu0 %63
    %v65 = vmul.f32 %v40, %v28
    %v66 = vmul.f32 %v42, %v29
    %v67 = vsel %vm30, %v65, 0.0
    %68 = vadd.xlane.f32.xlu0 %v67
    %v69 = vpop.xlane.xlu0 %68
    %v70 = vsel %vm30, %v66, 0.0
    %71 = vadd.xlane.f32.xlu0 %v70
    %v72 = vpop.xlane.xlu0 %71
    %v73 = vsub.f32 %v61, %v33
    %v74 = vsub.f32 %v64, %v36
    %v75 = vsub.f32 %v73, %v50
    %v76 = vsub.f32 %v74, %v52
    %v77 = vmul.f32 %v69, %v54
    %v78 = vmul.f32 %v72, %v56
    %v79 = vsub.f32 %v45, %v69
    %v80 = vsub.f32 %v48, %v72
    %v81 = vmul.f32 %v79, %v54
    %v82 = vmul.f32 %v80, %v56
    %v83 = vsub.f32 -0.105360515, %v75
    %v84 = vsub.f32 -0.105360515, %v76
    %v85 = vmul.f32 %v83, 0.9
    %v86 = vmul.f32 %v84, 0.9
    %v87 = vlog2.pop %v81
    %v88 = vmul.f32 %v87, 0.6931472
    %v89 = vlog2.pop %v82
    %v90 = vmul.f32 %v89, 0.6931472
    %v91 = vsub.f32 -2.3025851, %v88
    %v92 = vsub.f32 -2.3025851, %v90
    %v93 = vmul.f32 %v91, 0.1
    %v94 = vmul.f32 %v92, 0.1
    %v95 = vadd.f32 %v85, %v93
    %v96 = vadd.f32 %v86, %v94
    %s97 = smul.u32 0, 16
    %v98 = vlaneseq
    %v99 = vshrl.u32 %v98, 7
    %v100 = vadd.s32 %v99, 8
    %v101 = vstv %s97
    %v102 = vadd.s32 %v101, %v99
    %v103 = vadd.s32 %v101, %v100
    %vm104 = vcmp.lt.s32.totalorder %v102, 16
    %vm105 = vcmp.lt.s32.totalorder %v103, 16
    %v106 = vsel %vm104, %v95, 0.0
    %v107 = vsel %vm105, %v96, 0.0
    %vm108 = vcmask 7168
    %v109 = vsel %vm108, %v106, 0.0
    %v110 = vsel %vm108, %v107, 0.0
    %v111 = vadd.f32 %v109, %v110
    %112 = vadd.xlane.f32.xlu0 %v111
    %v113 = vpop.xlane.xlu0 %112
    %v114 = vrot.slane %v113, 4
    %v115 = vadd.f32 %v113, %v114
    %v116 = vrot.slane %v115, 2
    %v117 = vadd.f32 %v115, %v116
    %v118 = vrot.slane %v117, 1
    %v119 = vadd.f32 %v117, %v118
    %s120 = vtos %v119
    %vm121 = vcmp.le.f32.partialorder %v77, 0.9
    %vm122 = vcmp.le.f32.partialorder %v78, 0.9
    %vm123 = vmand %vm104, %vm121
    %vm124 = vmand %vm105, %vm122
    %v125 = vsel %vm123, 1.0, 0.0
    %v126 = vsel %vm124, 1.0, 0.0
    %v127 = vsel %vm108, %v125, 0.0
    %v128 = vsel %vm108, %v126, 0.0
    %v129 = vadd.f32 %v127, %v128
    %130 = vadd.xlane.f32.xlu0 %v129
    %v131 = vpop.xlane.xlu0 %130
    %v132 = vrot.slane %v131, 4
    %v133 = vadd.f32 %v131, %v132
    %v134 = vrot.slane %v133, 2
    %v135 = vadd.f32 %v133, %v134
    %v136 = vrot.slane %v135, 1
    %v137 = vadd.f32 %v135, %v136
    %s138 = vtos %v137
    %vm139 = vcmp.eq.s32.totalorder %v99, 0
    %vm140 = vcmp.eq.s32.totalorder %v99, 1
    %v141 = vstv %s138
    %v142 = vsel %vm140, %v141, 0.0
    %v143 = vstv %s120
    %v144 = vsel %vm139, %v143, %v142
    %145 = vst [vmem:[#allocation2] sm:$0xff] %v144
    // Predicated region
    $region10: #{tpu_custom_call.1} parent=1 // pred_check
      _
    $region11: #{tpu_custom_call.1} parent=1 // pred_check_branch
      %147 = sbr.rel (0) target = $region13
    $region12: #{tpu_custom_call.1} parent=1 // pred_region
      %s149 = ssub.s32 128, 128
      %150 = vsyncadd [#allocation3], %s149
      %s152 = sshll.u32 [#allocation2], 4
      %s153 = int_to_ptr.vmem [resolvable:$true] %s152
      %155 = dma.vmem_to_hbm [thread:$0]  %s153, 128, %s2, [#allocation3]
    $region13: #{tpu_custom_call.1} parent=1 // pred_fallthru
      _
    // Predicated region
    $region14: #{tpu_custom_call.1} parent=1 // pred_check
      _
    $region15: #{tpu_custom_call.1} parent=1 // pred_check_branch
      %157 = sbr.rel (0) target = $region17
    $region16: #{tpu_custom_call.1} parent=1 // pred_region
      %158 = dma.done [#allocation3], 128
    $region17: #{tpu_custom_call.1} parent=1 // pred_fallthru
      _
    %159 = vsyncpa [#allocation3], 1

</llo_original>
